<compile_context>
chip_gen: v5e
topology: v5e:2x2
jax: 0.10.0
libtpu: 0.0.40
codegen_flags: <defaults>
</compile_context>

<pallas_src>
import functools

import jax
import jax.numpy as jnp
from jax.experimental import pallas as pl
from jax.experimental.pallas import tpu as pltpu


def _mlp_kernel(x_ref, w1_ref, b1_ref, w2_ref, b2_ref, w3_ref, b3_ref, o_ref):
    # Layer 1: Linear(IN, 256) + ReLU   (bf16 x bf16 -> f32 accumulate)
    h1 = jnp.dot(x_ref[...], w1_ref[...], preferred_element_type=jnp.float32)
    h1 = jnp.maximum(h1 + b1_ref[...], 0.0)
    # Layer 2: Linear(256, 128) + ReLU  (cast activations back to bf16 for the MXU)
    h2 = jnp.dot(h1.astype(w2_ref.dtype), w2_ref[...],
                 preferred_element_type=jnp.float32)
    h2 = jnp.maximum(h2 + b2_ref[...], 0.0)
    # Layer 3: Linear(128, OUT_pad=128)  (no activation; padded lanes are exact zeros)
    o = jnp.dot(h2.astype(w3_ref.dtype), w3_ref[...],
                preferred_element_type=jnp.float32) + b3_ref[...]
    o_ref[...] = o.astype(o_ref.dtype)


def _round_up(a: int, m: int) -> int:
    return ((a + m - 1) // m) * m


@functools.partial(jax.jit, static_argnames=("tb_max",))
def torch_dnn_forward(x, params, *, tb_max: int = 512):
    """Fused 3-layer MLP forward. Returns flattened logits (matches logits.reshape(-1))."""
    w1, b1, w2, b2, w3, b3 = params
    B, in_dim = x.shape
    out_dim = w3.shape[1]
    OUT_PAD = 128  # lane-dense output width

    # --- Lane-dense output: zero-pad W3/b3 columns to 128 ---------------------------
    w3p = jnp.zeros((w3.shape[0], OUT_PAD), w3.dtype).at[:, :out_dim].set(w3)
    b3p = jnp.zeros((1, OUT_PAD), b3.dtype).at[:, :out_dim].set(b3)

    # --- bf16 operands for the MXU; biases / accumulation stay f32 -------------------
    cdt = jnp.bfloat16
    xc = x.astype(cdt)
    w1c, w2c, w3c = w1.astype(cdt), w2.astype(cdt), w3p.astype(cdt)
    b1f, b2f, b3f = (b.astype(jnp.float32) for b in (b1, b2, b3p))

    # --- Batch tiling: TB multiple of 8, capped at tb_max; pad B to a TB multiple ----
    TB = min(tb_max, _round_up(B, 8))
    B_pad = _round_up(B, TB)
    if B_pad != B:
        xc = jnp.pad(xc, ((0, B_pad - B), (0, 0)))
    grid = (pl.cdiv(B_pad, TB),)

    const2 = lambda i: (0, 0)  # resident weights/biases: same block every grid step

    logits_p = pl.pallas_call(
        _mlp_kernel,
        out_shape=jax.ShapeDtypeStruct((B_pad, OUT_PAD), jnp.float32),
        grid=grid,
        in_specs=[
            pl.BlockSpec((TB, in_dim), lambda i: (i, 0)),   # x: tiled over batch
            pl.BlockSpec(w1c.shape, const2),
            pl.BlockSpec(b1f.shape, const2),
            pl.BlockSpec(w2c.shape, const2),
            pl.BlockSpec(b2f.shape, const2),
            pl.BlockSpec(w3c.shape, const2),
            pl.BlockSpec(b3f.shape, const2),
        ],
        out_specs=pl.BlockSpec((TB, OUT_PAD), lambda i: (i, 0)),
        compiler_params=pltpu.CompilerParams(
            dimension_semantics=("parallel",),          # v7x: shard batch steps over 2 TCs
            vmem_limit_bytes=32 * 1024 * 1024,          # ample headroom on v5e/v6e/v7x
        ),
    )(xc, w1c, b1f, w2c, b2f, w3c, b3f)

    # Drop batch padding and zero-padded output lanes, then flatten (PyTorch reshape(-1)).
    return logits_p[:B, :out_dim].reshape(-1)


def init_params(key, input_shape, output_shape):
    """Deterministic init mimicking nn.Linear defaults: U(-1/sqrt(fan_in), 1/sqrt(fan_in)).
    Weights stored as [in_features, out_features] so layers compute x @ W + b
    (equivalent to PyTorch's x @ W.T + b with W of shape [out, in])."""
    dims = [(input_shape, 256), (256, 128), (128, output_shape)]
    params = []
    for fan_in, fan_out in dims:
        kw, kb, key = jax.random.split(key, 3)
        bound = 1.0 / jnp.sqrt(float(fan_in))
        w = jax.random.uniform(kw, (fan_in, fan_out), jnp.float32, -bound, bound)
        b = jax.random.uniform(kb, (1, fan_out), jnp.float32, -bound, bound)
        params += [w, b]
    return tuple(params)


def _reference_f32(x, params):
    w1, b1, w2, b2, w3, b3 = params
    h1 = jnp.maximum(x @ w1 + b1, 0.0)
    h2 = jnp.maximum(h1 @ w2 + b2, 0.0)
    return (h2 @ w3 + b3).reshape(-1)


def _reference_bf16(x, params):
    """Reference using the same bf16 operands / f32 accumulation as the kernel."""
    w1, b1, w2, b2, w3, b3 = params
    dt = jnp.bfloat16
    h1 = jnp.maximum(
        jnp.dot(x.astype(dt), w1.astype(dt), preferred_element_type=jnp.float32) + b1, 0.0)
    h2 = jnp.maximum(
        jnp.dot(h1.astype(dt), w2.astype(dt), preferred_element_type=jnp.float32) + b2, 0.0)
    o = jnp.dot(h2.astype(dt), w3.astype(dt), preferred_element_type=jnp.float32) + b3
    return o.reshape(-1)


if __name__ == "__main__":
    key = jax.random.PRNGKey(0)
    kx1, kx2, kp = jax.random.split(key, 3)

    IN, OUT = 16, 4
    params = init_params(kp, IN, OUT)

    # Case 1: tiny deployment shape (batch=2) — single grid step, batch padded to 8.
    B1 = 2
    x1 = jax.random.normal(kx1, (B1, IN), jnp.float32)
    out1 = jax.block_until_ready(torch_dnn_forward(x1, params))
    assert out1.shape == (B1 * OUT,)
    assert jnp.allclose(out1, _reference_bf16(x1, params), atol=1e-2, rtol=1e-2)
    assert jnp.allclose(out1, _reference_f32(x1, params), atol=6e-2, rtol=6e-2)

    # Case 2: non-multiple batch exercising the tiled grid + padding path.
    B2 = 1037
    x2 = jax.random.normal(kx2, (B2, IN), jnp.float32)
    out2 = jax.block_until_ready(torch_dnn_forward(x2, params))
    assert out2.shape == (B2 * OUT,)
    assert jnp.allclose(out2, _reference_bf16(x2, params), atol=1e-2, rtol=1e-2)
    assert jnp.allclose(out2, _reference_f32(x2, params), atol=6e-2, rtol=6e-2)

    print("KERNEL_OK")
</pallas_src>

<mosaic_0001>
module attributes {stable_mosaic.version = 11 : i64} {
  func.func @_mlp_kernel(%arg0: i32, %arg1: memref<8x16xbf16, #tpu.memory_space<vmem>>, %arg2: memref<16x256xbf16, #tpu.memory_space<vmem>>, %arg3: memref<1x256xf32, #tpu.memory_space<vmem>>, %arg4: memref<256x128xbf16, #tpu.memory_space<vmem>>, %arg5: memref<1x128xf32, #tpu.memory_space<vmem>>, %arg6: memref<128x128xbf16, #tpu.memory_space<vmem>>, %arg7: memref<1x128xf32, #tpu.memory_space<vmem>>, %arg8: memref<8x128xf32, #tpu.memory_space<vmem>>) attributes {dimension_semantics = [#tpu.dimension_semantics<parallel>], iteration_bounds = array<i64: 1>, scalar_prefetch = 0 : i64, scratch_operands = 0 : i64, tpu.core_type = #tpu.core_type<tc>, window_params = [{transform_indices = @transform_0, window_bounds = array<i64: 8, 16>}, {pipeline_mode = #tpu.pipeline_mode<synchronous>, transform_indices = @transform_1, window_bounds = array<i64: 16, 256>}, {pipeline_mode = #tpu.pipeline_mode<synchronous>, transform_indices = @transform_2, window_bounds = array<i64: 1, 256>}, {pipeline_mode = #tpu.pipeline_mode<synchronous>, transform_indices = @transform_3, window_bounds = array<i64: 256, 128>}, {pipeline_mode = #tpu.pipeline_mode<synchronous>, transform_indices = @transform_4, window_bounds = array<i64: 1, 128>}, {pipeline_mode = #tpu.pipeline_mode<synchronous>, transform_indices = @transform_5, window_bounds = array<i64: 128, 128>}, {pipeline_mode = #tpu.pipeline_mode<synchronous>, transform_indices = @transform_6, window_bounds = array<i64: 1, 128>}, {transform_indices = @transform_7, window_bounds = array<i64: 8, 128>}]} {
    %c0 = arith.constant 0 : index
    %c0_0 = arith.constant 0 : index
    %0 = vector.load %arg1[%c0, %c0_0] : memref<8x16xbf16, #tpu.memory_space<vmem>>, vector<8x16xbf16>
    %c0_1 = arith.constant 0 : index
    %c0_2 = arith.constant 0 : index
    %1 = vector.load %arg2[%c0_1, %c0_2] : memref<16x256xbf16, #tpu.memory_space<vmem>>, vector<16x256xbf16>
    %cst = arith.constant dense<0.000000e+00> : vector<8x256xf32>
    %2 = tpu.matmul %0, %1, %cst {dimension_numbers = #tpu.dot_dimension_numbers<[1], [0], [0], [1], [0, 0, 1, 1], [], []>} : vector<8x16xbf16>, vector<16x256xbf16>, vector<8x256xf32> -> vector<8x256xf32>
    %c0_3 = arith.constant 0 : index
    %c0_4 = arith.constant 0 : index
    %3 = vector.load %arg3[%c0_3, %c0_4] : memref<1x256xf32, #tpu.memory_space<vmem>>, vector<1x256xf32>
    %4 = vector.broadcast %3 : vector<1x256xf32> to vector<8x256xf32>
    %5 = arith.addf %2, %4 : vector<8x256xf32>
    %cst_5 = arith.constant 0.000000e+00 : f32
    %6 = vector.broadcast %cst_5 : f32 to vector<8x256xf32>
    %7 = arith.maximumf %5, %6 : vector<8x256xf32>
    %8 = arith.truncf %7 : vector<8x256xf32> to vector<8x256xbf16>
    %c0_6 = arith.constant 0 : index
    %c0_7 = arith.constant 0 : index
    %9 = vector.load %arg4[%c0_6, %c0_7] : memref<256x128xbf16, #tpu.memory_space<vmem>>, vector<256x128xbf16>
    %cst_8 = arith.constant dense<0.000000e+00> : vector<8x128xf32>
    %10 = tpu.matmul %8, %9, %cst_8 {dimension_numbers = #tpu.dot_dimension_numbers<[1], [0], [0], [1], [0, 0, 1, 1], [], []>} : vector<8x256xbf16>, vector<256x128xbf16>, vector<8x128xf32> -> vector<8x128xf32>
    %c0_9 = arith.constant 0 : index
    %c0_10 = arith.constant 0 : index
    %11 = vector.load %arg5[%c0_9, %c0_10] : memref<1x128xf32, #tpu.memory_space<vmem>>, vector<1x128xf32>
    %12 = vector.broadcast %11 : vector<1x128xf32> to vector<8x128xf32>
    %13 = arith.addf %10, %12 : vector<8x128xf32>
    %cst_11 = arith.constant 0.000000e+00 : f32
    %14 = vector.broadcast %cst_11 : f32 to vector<8x128xf32>
    %15 = arith.maximumf %13, %14 : vector<8x128xf32>
    %16 = arith.truncf %15 : vector<8x128xf32> to vector<8x128xbf16>
    %c0_12 = arith.constant 0 : index
    %c0_13 = arith.constant 0 : index
    %17 = vector.load %arg6[%c0_12, %c0_13] : memref<128x128xbf16, #tpu.memory_space<vmem>>, vector<128x128xbf16>
    %cst_14 = arith.constant dense<0.000000e+00> : vector<8x128xf32>
    %18 = tpu.matmul %16, %17, %cst_14 {dimension_numbers = #tpu.dot_dimension_numbers<[1], [0], [0], [1], [0, 0, 1, 1], [], []>} : vector<8x128xbf16>, vector<128x128xbf16>, vector<8x128xf32> -> vector<8x128xf32>
    %c0_15 = arith.constant 0 : index
    %c0_16 = arith.constant 0 : index
    %19 = vector.load %arg7[%c0_15, %c0_16] : memref<1x128xf32, #tpu.memory_space<vmem>>, vector<1x128xf32>
    %20 = vector.broadcast %19 : vector<1x128xf32> to vector<8x128xf32>
    %21 = arith.addf %18, %20 : vector<8x128xf32>
    %c0_17 = arith.constant 0 : index
    %c0_18 = arith.constant 0 : index
    %22 = vector.load %arg8[%c0_17, %c0_18] : memref<8x128xf32, #tpu.memory_space<vmem>>, vector<8x128xf32>
    tpu.vector_store %arg8[%c0_17, %c0_18], %21 {strides = array<i32>} : memref<8x128xf32, #tpu.memory_space<vmem>>, vector<8x128xf32>,
    return
  }
  func.func @transform_0(%arg0: i32) -> (i32, i32) {
    %c0_i32 = arith.constant 0 : i32
    %c0_i32_0 = arith.constant 0 : i32
    return %arg0, %c0_i32 : i32, i32
  }
  func.func @transform_1(%arg0: i32) -> (i32, i32) {
    %c0_i32 = arith.constant 0 : i32
    %c0_i32_0 = arith.constant 0 : i32
    %c0_i32_1 = arith.constant 0 : i32
    return %c0_i32, %c0_i32_0 : i32, i32
  }
  func.func @transform_2(%arg0: i32) -> (i32, i32) {
    %c0_i32 = arith.constant 0 : i32
    %c0_i32_0 = arith.constant 0 : i32
    %c0_i32_1 = arith.constant 0 : i32
    return %c0_i32, %c0_i32_0 : i32, i32
  }
  func.func @transform_3(%arg0: i32) -> (i32, i32) {
    %c0_i32 = arith.constant 0 : i32
    %c0_i32_0 = arith.constant 0 : i32
    %c0_i32_1 = arith.constant 0 : i32
    return %c0_i32, %c0_i32_0 : i32, i32
  }
  func.func @transform_4(%arg0: i32) -> (i32, i32) {
    %c0_i32 = arith.constant 0 : i32
    %c0_i32_0 = arith.constant 0 : i32
    %c0_i32_1 = arith.constant 0 : i32
    return %c0_i32, %c0_i32_0 : i32, i32
  }
  func.func @transform_5(%arg0: i32) -> (i32, i32) {
    %c0_i32 = arith.constant 0 : i32
    %c0_i32_0 = arith.constant 0 : i32
    %c0_i32_1 = arith.constant 0 : i32
    return %c0_i32, %c0_i32_0 : i32, i32
  }
  func.func @transform_6(%arg0: i32) -> (i32, i32) {
    %c0_i32 = arith.constant 0 : i32
    %c0_i32_0 = arith.constant 0 : i32
    %c0_i32_1 = arith.constant 0 : i32
    return %c0_i32, %c0_i32_0 : i32, i32
  }
  func.func @transform_7(%arg0: i32) -> (i32, i32) {
    %c0_i32 = arith.constant 0 : i32
    %c0_i32_0 = arith.constant 0 : i32
    return %arg0, %c0_i32 : i32, i32
  }
}

</mosaic_0001>

<llo_original>
// kernel: torch_dnn_forward.1
$region0: #{torch_dnn_forward.1}
  #allocation0 [shape = 'u32[]', space=smem, size = 0x4, offset = 0x4, fixed_abs, tag = 'smem constant byte address 0x4 - core index']
  #allocation1 [shape = 'u32[72,128]{1,0:T(1,128)}', space=vmem, size = 0x9000, scoped, tag = 'internal scratch']
  %s0 = inlined_call_operand.vmem [shape: bf16[8,16], index: 0, kind: input, shape index: {}]
  %s1 = inlined_call_operand.vmem [shape: bf16[16,256], index: 1, kind: input, shape index: {}]
  %s2 = inlined_call_operand.vmem [shape: f32[1,256], index: 2, kind: input, shape index: {}]
  %s3 = inlined_call_operand.vmem [shape: bf16[256,128], index: 3, kind: input, shape index: {}]
  %s4 = inlined_call_operand.vmem [shape: f32[1,128], index: 4, kind: input, shape index: {}]
  %s5 = inlined_call_operand.vmem [shape: bf16[128,128], index: 5, kind: input, shape index: {}]
  %s6 = inlined_call_operand.vmem [shape: f32[1,128], index: 6, kind: input, shape index: {}]
  %s7 = inlined_call_operand.vmem [shape: f32[8,128], index: 7, kind: output, shape index: {}]
  %s8 = sld [smem:[#allocation0]]
  $region38: #{torch_dnn_forward.1} parent=0
    _
  %s10 = ssub.s32 1, %s8
  %s11 = scalar_select 0, %s10, %s8
  // Predicated region
  $region2: #{torch_dnn_forward.1} parent=0 // pred_check
    _
  $region3: #{torch_dnn_forward.1} parent=0 // pred_check_branch
    %13 = sbr.rel (0) target = $region5
  $region4: #{torch_dnn_forward.1} parent=0 // pred_region
    _
  $region5: #{torch_dnn_forward.1} parent=0 // pred_fallthru
    _
  // Predicated region
  $region6: #{torch_dnn_forward.1} parent=0 // pred_check
    _
  $region7: #{torch_dnn_forward.1} parent=0 // pred_check_branch
    %15 = sbr.rel (0) target = $region9
  $region8: #{torch_dnn_forward.1} parent=0 // pred_region
    _
  $region9: #{torch_dnn_forward.1} parent=0 // pred_fallthru
    _
  // Predicated region
  $region10: #{torch_dnn_forward.1} parent=0 // pred_check
    _
  $region11: #{torch_dnn_forward.1} parent=0 // pred_check_branch
    %17 = sbr.rel (0) target = $region13
  $region12: #{torch_dnn_forward.1} parent=0 // pred_region
    _
  $region13: #{torch_dnn_forward.1} parent=0 // pred_fallthru
    _
  // Predicated region
  $region14: #{torch_dnn_forward.1} parent=0 // pred_check
    _
  $region15: #{torch_dnn_forward.1} parent=0 // pred_check_branch
    %19 = sbr.rel (0) target = $region17
  $region16: #{torch_dnn_forward.1} parent=0 // pred_region
    _
  $region17: #{torch_dnn_forward.1} parent=0 // pred_fallthru
    _
  // Predicated region
  $region18: #{torch_dnn_forward.1} parent=0 // pred_check
    _
  $region19: #{torch_dnn_forward.1} parent=0 // pred_check_branch
    %21 = sbr.rel (0) target = $region21
  $region20: #{torch_dnn_forward.1} parent=0 // pred_region
    _
  $region21: #{torch_dnn_forward.1} parent=0 // pred_fallthru
    _
  // Predicated region
  $region22: #{torch_dnn_forward.1} parent=0 // pred_check
    _
  $region23: #{torch_dnn_forward.1} parent=0 // pred_check_branch
    %23 = sbr.rel (0) target = $region25
  $region24: #{torch_dnn_forward.1} parent=0 // pred_region
    _
  $region25: #{torch_dnn_forward.1} parent=0 // pred_fallthru
    _
  // Predicated region
  $region26: #{torch_dnn_forward.1} parent=0 // pred_check
    _
  $region27: #{torch_dnn_forward.1} parent=0 // pred_check_branch
    %25 = sbr.rel (0) target = $region29
  $region28: #{torch_dnn_forward.1} parent=0 // pred_region
    _
  $region29: #{torch_dnn_forward.1} parent=0 // pred_fallthru
    _
  %v27 = vld [vmem:[%s0] sm:$0xf]
  %v28 = vld [vmem:[%s1] sm:$0xff]
  %v29 = vld [vmem:[%s1 + $0x8] sm:$0xff]
  %v30 = vld [vmem:[%s2] sm:$0x3]
  %v32 = vperm.slane %v30, 0
  %v33 = vperm.slane %v30, 1
  %v38 = vunpack.c.l.b16 %v28
  %v39 = vunpack.c.h.b16 %v28
  %v40 = vunpack.c.l.b16 %v29
  %v41 = vunpack.c.h.b16 %v29
  %v42 = vpack.c.b16 %v40, %v38
  %v43 = vpack.c.b16 %v41, %v39
  %vm46 = vcmask 130048
  %v48 = vsel %vm46, %v27, 0
  %50 = vmatpush.bf16.msra.mxu0 0
  %51 = vmatpush.bf16.msra.mxu0 0
  %52 = vmatpush.bf16.msra.mxu0 0
  %53 = vmatpush.bf16.msra.mxu0 0
  %54 = vmatpush.bf16.msra.mxu0 0
  %55 = vmatpush.bf16.msra.mxu0 0
  %56 = vmatpush.bf16.msra.mxu0 0
  %57 = vmatpush.bf16.msra.mxu0 %v42
  %58 = vmatmul.bf16.gmra.mxu0 %v48
  %v59 = vpop.f32.mrf.mxu0
  %v60 = vadd.f32 %v32, %v59
  %v61 = vpop.f32.mrf.mxu0
  %62 = vdwg.mxu0
  %63 = vmatpush.bf16.msra.mxu0 0
  %64 = vmatpush.bf16.msra.mxu0 0
  %65 = vmatpush.bf16.msra.mxu0 0
  %66 = vmatpush.bf16.msra.mxu0 0
  %67 = vmatpush.bf16.msra.mxu0 0
  %68 = vmatpush.bf16.msra.mxu0 0
  %69 = vmatpush.bf16.msra.mxu0 0
  %70 = vmatpush.bf16.msra.mxu0 %v43
  %71 = vmatmul.bf16.gmra.mxu0 %v48
  %v72 = vpop.f32.mrf.mxu0
  %v73 = vadd.f32 %v33, %v72
  %v74 = vpop.f32.mrf.mxu0
  %75 = vdwg.mxu0
  %v76 = vmax.f32 %v60, 0.0
  %v77 = vmax.f32 %v73, 0.0
  %v78 = vpack.c.bf16 %v76, %v76
  %v79 = vpack.c.bf16 %v77, %v77
  %v80 = vld [vmem:[%s3] sm:$0xf]
  %v81 = vld [vmem:[%s3 + $0x4] sm:$0xf]
  %v82 = vld [vmem:[%s3 + $0x8] sm:$0xf]
  %v83 = vld [vmem:[%s3 + $0xc] sm:$0xf]
  %v84 = vld [vmem:[%s3 + $0x10] sm:$0xf]
  %v85 = vld [vmem:[%s3 + $0x14] sm:$0xf]
  %v86 = vld [vmem:[%s3 + $0x18] sm:$0xf]
  %v87 = vld [vmem:[%s3 + $0x1c] sm:$0xf]
  %v88 = vld [vmem:[%s3 + $0x20] sm:$0xf]
  %v89 = vld [vmem:[%s3 + $0x24] sm:$0xf]
  %v90 = vld [vmem:[%s3 + $0x28] sm:$0xf]
  %v91 = vld [vmem:[%s3 + $0x2c] sm:$0xf]
  %v92 = vld [vmem:[%s3 + $0x30] sm:$0xf]
  %v93 = vld [vmem:[%s3 + $0x34] sm:$0xf]
  %v94 = vld [vmem:[%s3 + $0x38] sm:$0xf]
  %v95 = vld [vmem:[%s3 + $0x3c] sm:$0xf]
  %v96 = vld [vmem:[%s3 + $0x40] sm:$0xf]
  %v97 = vld [vmem:[%s3 + $0x44] sm:$0xf]
  %v98 = vld [vmem:[%s3 + $0x48] sm:$0xf]
  %v99 = vld [vmem:[%s3 + $0x4c] sm:$0xf]
  %v100 = vld [vmem:[%s3 + $0x50] sm:$0xf]
  %v101 = vld [vmem:[%s3 + $0x54] sm:$0xf]
  %v102 = vld [vmem:[%s3 + $0x58] sm:$0xf]
  %v103 = vld [vmem:[%s3 + $0x5c] sm:$0xf]
  %v104 = vld [vmem:[%s3 + $0x60] sm:$0xf]
  %v105 = vld [vmem:[%s3 + $0x64] sm:$0xf]
  %v106 = vld [vmem:[%s3 + $0x68] sm:$0xf]
  %v107 = vld [vmem:[%s3 + $0x6c] sm:$0xf]
  %v108 = vld [vmem:[%s3 + $0x70] sm:$0xf]
  %v109 = vld [vmem:[%s3 + $0x74] sm:$0xf]
  %v110 = vld [vmem:[%s3 + $0x78] sm:$0xf]
  %v111 = vld [vmem:[%s3 + $0x7c] sm:$0xf]
  %v112 = vld [vmem:[%s4] sm:$0x1]
  %v114 = vperm.slane %v112, 0
  %v148 = vunpack.c.l.b16 %v80
  %v149 = vunpack.c.l.b16 %v81
  %v150 = vunpack.c.l.b16 %v82
  %v151 = vunpack.c.l.b16 %v83
  %v152 = vunpack.c.l.b16 %v84
  %v153 = vunpack.c.l.b16 %v85
  %v154 = vunpack.c.l.b16 %v86
  %v155 = vunpack.c.l.b16 %v87
  %v156 = vunpack.c.l.b16 %v88
  %v157 = vunpack.c.l.b16 %v89
  %v158 = vunpack.c.l.b16 %v90
  %v159 = vunpack.c.l.b16 %v91
  %v160 = vunpack.c.l.b16 %v92
  %v161 = vunpack.c.l.b16 %v93
  %v162 = vunpack.c.l.b16 %v94
  %v163 = vunpack.c.l.b16 %v95
  %v164 = vunpack.c.l.b16 %v96
  %v165 = vunpack.c.l.b16 %v97
  %v166 = vunpack.c.l.b16 %v98
  %v167 = vunpack.c.l.b16 %v99
  %v168 = vunpack.c.l.b16 %v100
  %v169 = vunpack.c.l.b16 %v101
  %v170 = vunpack.c.l.b16 %v102
  %v171 = vunpack.c.l.b16 %v103
  %v172 = vunpack.c.l.b16 %v104
  %v173 = vunpack.c.l.b16 %v105
  %v174 = vunpack.c.l.b16 %v106
  %v175 = vunpack.c.l.b16 %v107
  %v176 = vunpack.c.l.b16 %v108
  %v177 = vunpack.c.l.b16 %v109
  %v178 = vunpack.c.l.b16 %v110
  %v179 = vunpack.c.l.b16 %v111
  %v180 = vpack.c.b16 %v149, %v148
  %v181 = vpack.c.b16 %v151, %v150
  %v182 = vpack.c.b16 %v153, %v152
  %v183 = vpack.c.b16 %v155, %v154
  %v184 = vpack.c.b16 %v157, %v156
  %v185 = vpack.c.b16 %v159, %v158
  %v186 = vpack.c.b16 %v161, %v160
  %v187 = vpack.c.b16 %v163, %v162
  %v188 = vpack.c.b16 %v165, %v164
  %v189 = vpack.c.b16 %v167, %v166
  %v190 = vpack.c.b16 %v169, %v168
  %v191 = vpack.c.b16 %v171, %v170
  %v192 = vpack.c.b16 %v173, %v172
  %v193 = vpack.c.b16 %v175, %v174
  %v194 = vpack.c.b16 %v177, %v176
  %v195 = vpack.c.b16 %v179, %v178
  %212 = vmatpush.bf16.msra.mxu0 %v187
  %213 = vmatpush.bf16.msra.mxu0 %v186
  %214 = vmatpush.bf16.msra.mxu0 %v185
  %215 = vmatpush.bf16.msra.mxu0 %v184
  %216 = vmatpush.bf16.msra.mxu0 %v183
  %217 = vmatpush.bf16.msra.mxu0 %v182
  %218 = vmatpush.bf16.msra.mxu0 %v181
  %219 = vmatpush.bf16.msra.mxu0 %v180
  %220 = vmatmul.bf16.gmra.mxu0 %v78
  %v221 = vpop.f32.mrf.mxu0
  %v222 = vadd.f32 %v114, %v221
  %v223 = vpop.f32.mrf.mxu0
  %224 = vdwg.mxu0
  %225 = vmatpush.bf16.msra.mxu0 %v195
  %226 = vmatpush.bf16.msra.mxu0 %v194
  %227 = vmatpush.bf16.msra.mxu0 %v193
  %228 = vmatpush.bf16.msra.mxu0 %v192
  %229 = vmatpush.bf16.msra.mxu0 %v191
  %230 = vmatpush.bf16.msra.mxu0 %v190
  %231 = vmatpush.bf16.msra.mxu0 %v189
  %232 = vmatpush.bf16.msra.mxu0 %v188
  %233 = vmatmul.bf16.gmra.mxu0 %v79
  %v234 = vpop.f32.mrf.mxu0
  %v235 = vadd.f32 %v222, %v234
  %v236 = vpop.f32.mrf.mxu0
  %237 = vdwg.mxu0
  %v238 = vmax.f32 %v235, 0.0
  %v239 = vpack.c.bf16 %v238, %v238
  %v240 = vld [vmem:[%s5] sm:$0xf]
  %v241 = vld [vmem:[%s5 + $0x4] sm:$0xf]
  %v242 = vld [vmem:[%s5 + $0x8] sm:$0xf]
  %v243 = vld [vmem:[%s5 + $0xc] sm:$0xf]
  %v244 = vld [vmem:[%s5 + $0x10] sm:$0xf]
  %v245 = vld [vmem:[%s5 + $0x14] sm:$0xf]
  %v246 = vld [vmem:[%s5 + $0x18] sm:$0xf]
  %v247 = vld [vmem:[%s5 + $0x1c] sm:$0xf]
  %v248 = vld [vmem:[%s5 + $0x20] sm:$0xf]
  %v249 = vld [vmem:[%s5 + $0x24] sm:$0xf]
  %v250 = vld [vmem:[%s5 + $0x28] sm:$0xf]
  %v251 = vld [vmem:[%s5 + $0x2c] sm:$0xf]
  %v252 = vld [vmem:[%s5 + $0x30] sm:$0xf]
  %v253 = vld [vmem:[%s5 + $0x34] sm:$0xf]
  %v254 = vld [vmem:[%s5 + $0x38] sm:$0xf]
  %v255 = vld [vmem:[%s5 + $0x3c] sm:$0xf]
  %v256 = vld [vmem:[%s6] sm:$0x1]
  %v258 = vperm.slane %v256, 0
  %v276 = vunpack.c.l.b16 %v240
  %v277 = vunpack.c.l.b16 %v241
  %v278 = vunpack.c.l.b16 %v242
  %v279 = vunpack.c.l.b16 %v243
  %v280 = vunpack.c.l.b16 %v244
  %v281 = vunpack.c.l.b16 %v245
  %v282 = vunpack.c.l.b16 %v246
  %v283 = vunpack.c.l.b16 %v247
  %v284 = vunpack.c.l.b16 %v248
  %v285 = vunpack.c.l.b16 %v249
  %v286 = vunpack.c.l.b16 %v250
  %v287 = vunpack.c.l.b16 %v251
  %v288 = vunpack.c.l.b16 %v252
  %v289 = vunpack.c.l.b16 %v253
  %v290 = vunpack.c.l.b16 %v254
  %v291 = vunpack.c.l.b16 %v255
  %v292 = vpack.c.b16 %v277, %v276
  %v293 = vpack.c.b16 %v279, %v278
  %v294 = vpack.c.b16 %v281, %v280
  %v295 = vpack.c.b16 %v283, %v282
  %v296 = vpack.c.b16 %v285, %v284
  %v297 = vpack.c.b16 %v287, %v286
  %v298 = vpack.c.b16 %v289, %v288
  %v299 = vpack.c.b16 %v291, %v290
  %308 = vmatpush.bf16.msra.mxu0 %v299
  %309 = vmatpush.bf16.msra.mxu0 %v298
  %310 = vmatpush.bf16.msra.mxu0 %v297
  %311 = vmatpush.bf16.msra.mxu0 %v296
  %312 = vmatpush.bf16.msra.mxu0 %v295
  %313 = vmatpush.bf16.msra.mxu0 %v294
  %314 = vmatpush.bf16.msra.mxu0 %v293
  %315 = vmatpush.bf16.msra.mxu0 %v292
  %316 = vmatmul.bf16.gmra.mxu0 %v239
  %v317 = vpop.f32.mrf.mxu0
  %v318 = vadd.f32 %v258, %v317
  %v319 = vpop.f32.mrf.mxu0
  %320 = vdwg.mxu0
  %321 = vst [vmem:[%s7] sm:$0xff] %v318
  // Predicated region
  $region30: #{torch_dnn_forward.1} parent=0 // pred_check
    _
  $region31: #{torch_dnn_forward.1} parent=0 // pred_check_branch
    %323 = sbr.rel (0) target = $region33
  $region32: #{torch_dnn_forward.1} parent=0 // pred_region
    _
  $region33: #{torch_dnn_forward.1} parent=0 // pred_fallthru
    _
  // Predicated region
  $region34: #{torch_dnn_forward.1} parent=0 // pred_check
    _
  $region35: #{torch_dnn_forward.1} parent=0 // pred_check_branch
    %325 = sbr.rel (0) target = $region37
  $region36: #{torch_dnn_forward.1} parent=0 // pred_region
    _
  $region37: #{torch_dnn_forward.1} parent=0 // pred_fallthru
    _

</llo_original>
